<compile_context>
chip_gen: v5e
topology: v5e:2x2
jax: 0.10.0
libtpu: 0.0.40
codegen_flags: <defaults>
</compile_context>

<pallas_src>
import jax
import jax.numpy as jnp
from jax.experimental import pallas as pl
from jax.experimental.pallas import tpu as pltpu


# ---------------------------------------------------------------------------
# count2vector path:  Conv1d(1, E, 1)  ==  x[b, s] * w[e] + bias[e]
# ---------------------------------------------------------------------------
def _count2vector_kernel(x_ref, w_ref, b_ref, o_ref):
    # x_ref: (tile_n, 1)   token counts (column)
    # w_ref: (1, E)        conv weight  (w[e] = weight[e, 0, 0])
    # b_ref: (1, E)        conv bias
    # o_ref: (tile_n, E)   lane-dense output block
    o_ref[...] = (x_ref[...] * w_ref[...] + b_ref[...]).astype(o_ref.dtype)


def count2vector(x, w, b, *, tile_n=256):
    """x: [batch, seq] counts; w, b: [E].  Returns [batch, seq, E]."""
    batch, seq = x.shape
    E = w.shape[0]
    N = batch * seq
    n_pad = pl.cdiv(N, tile_n) * tile_n

    x2 = x.reshape(N, 1)
    if n_pad != N:
        x2 = jnp.pad(x2, ((0, n_pad - N), (0, 0)))
    w2 = w.reshape(1, E)
    b2 = b.reshape(1, E)

    itemsize = jnp.dtype(x.dtype).itemsize
    out = pl.pallas_call(
        _count2vector_kernel,
        out_shape=jax.ShapeDtypeStruct((n_pad, E), x.dtype),
        grid_spec=pltpu.PrefetchScalarGridSpec(
            num_scalar_prefetch=0,
            grid=(n_pad // tile_n,),
            in_specs=[
                pl.BlockSpec((tile_n, 1), lambda i: (i, 0)),   # x tile
                pl.BlockSpec((1, E), lambda i: (0, 0)),        # conv weight
                pl.BlockSpec((1, E), lambda i: (0, 0)),        # conv bias
            ],
            out_specs=pl.BlockSpec((tile_n, E), lambda i: (i, 0)),
        ),
        compiler_params=pltpu.CompilerParams(
            dimension_semantics=("parallel",)),
        cost_estimate=pl.CostEstimate(
            flops=2 * n_pad * E,
            transcendentals=0,
            bytes_accessed=(n_pad + 2 * E + n_pad * E) * itemsize),
    )(x2, w2, b2)

    return out[:N].reshape(batch, seq, E)


# ---------------------------------------------------------------------------
# gene2vector path:  embedding-table gather (data-dependent row DMAs)
# ---------------------------------------------------------------------------
def _gene2vector_kernel(ids_ref, table_hbm, o_ref, buf, sems):
    # ids_ref  : SMEM (n_pad,) int32 gene ids (scalar-prefetched)
    # table_hbm: (V, E) embedding table, left in HBM (pl.ANY)
    # o_ref    : (tile_t, E) output block for this grid step
    # buf      : VMEM (tile_t, E) gather landing buffer
    # sems     : DMA semaphores, one per in-flight row copy
    t = pl.program_id(0)
    tile_t = buf.shape[0]
    base = t * tile_t

    # Issue all row DMAs for this block (they overlap in flight), then wait.
    copies = []
    for j in range(tile_t):
        row = ids_ref[base + j]
        cp = pltpu.make_async_copy(
            table_hbm.at[pl.ds(row, 1), :], buf.at[pl.ds(j, 1), :], sems.at[j])
        cp.start()
        copies.append(cp)
    for cp in copies:
        cp.wait()

    o_ref[...] = buf[...]


def gene2vector(ids, table, *, tile_t=8):
    """ids: [batch, seq] int gene ids; table: [V, E].  Returns [batch, seq, E]."""
    batch, seq = ids.shape
    V, E = table.shape
    N = batch * seq
    n_pad = pl.cdiv(N, tile_t) * tile_t

    flat = ids.reshape(N).astype(jnp.int32)
    if n_pad != N:
        flat = jnp.pad(flat, (0, n_pad - N))   # pad with id 0 (a valid row)

    out = pl.pallas_call(
        _gene2vector_kernel,
        out_shape=jax.ShapeDtypeStruct((n_pad, E), table.dtype),
        grid_spec=pltpu.PrefetchScalarGridSpec(
            num_scalar_prefetch=1,                      # gene ids -> SMEM
            grid=(n_pad // tile_t,),
            in_specs=[pl.BlockSpec(memory_space=pl.ANY)],  # table stays in HBM
            out_specs=pl.BlockSpec((tile_t, E), lambda t, ids: (t, 0)),
            scratch_shapes=[
                pltpu.VMEM((tile_t, E), table.dtype),
                pltpu.SemaphoreType.DMA((tile_t,)),
            ],
        ),
        compiler_params=pltpu.CompilerParams(
            dimension_semantics=("arbitrary",)),
    )(flat, table)

    return out[:N].reshape(batch, seq, E)


# ---------------------------------------------------------------------------
# Module wrapper mirroring Embedding_block.forward(x, gene=...)
# ---------------------------------------------------------------------------
def embedding_block(x, params, gene=False):
    if gene:
        return gene2vector(x, params["embedding_table"])
    return count2vector(x, params["conv_w"], params["conv_b"])


if __name__ == "__main__":
    batch, seq = 2, 8
    embedding_dim, max_gene_num = 128, 512   # lane-dense feature dim (x128)

    key = jax.random.PRNGKey(0)
    kx, kg, kw, kb, kt = jax.random.split(key, 5)

    # Inputs for both forward paths.
    x_counts = jax.random.normal(kx, (batch, seq), jnp.float32)
    x_gene = jax.random.randint(kg, (batch, seq), 0, max_gene_num, jnp.int32)

    # Parameters (Conv1d(1, E, 1): fan_in = 1 -> uniform(-1, 1); Embedding: N(0, 1)).
    params = {
        "conv_w": jax.random.uniform(kw, (embedding_dim,), jnp.float32, -1.0, 1.0),
        "conv_b": jax.random.uniform(kb, (embedding_dim,), jnp.float32, -1.0, 1.0),
        "embedding_table": jax.random.normal(
            kt, (max_gene_num, embedding_dim), jnp.float32),
    }

    # gene=False path: Conv1d(1, E, 1) + permute  -> [batch, seq, E]
    out_counts = embedding_block(x_counts, params, gene=False)
    out_counts = jax.block_until_ready(out_counts)
    ref_counts = (x_counts[:, :, None] * params["conv_w"][None, None, :]
                  + params["conv_b"][None, None, :])
    assert out_counts.shape == (batch, seq, embedding_dim)
    assert jnp.allclose(out_counts, ref_counts, atol=1e-6, rtol=1e-6), \
        "count2vector mismatch vs reference"

    # gene=True path: embedding lookup -> [batch, seq, E]
    out_gene = embedding_block(x_gene, params, gene=True)
    out_gene = jax.block_until_ready(out_gene)
    ref_gene = params["embedding_table"][x_gene]
    assert out_gene.shape == (batch, seq, embedding_dim)
    assert jnp.array_equal(out_gene, ref_gene), \
        "gene2vector mismatch vs reference"

    print("KERNEL_OK")
</pallas_src>

<mosaic_0001>
module attributes {stable_mosaic.version = 11 : i64} {
  func.func @_count2vector_kernel(%arg0: i32, %arg1: memref<256x1xf32, #tpu.memory_space<vmem>>, %arg2: memref<1x128xf32, #tpu.memory_space<vmem>>, %arg3: memref<1x128xf32, #tpu.memory_space<vmem>>, %arg4: memref<256x128xf32, #tpu.memory_space<vmem>>) attributes {dimension_semantics = [#tpu.dimension_semantics<parallel>], iteration_bounds = array<i64: 1>, scalar_prefetch = 0 : i64, scratch_operands = 0 : i64, tpu.core_type = #tpu.core_type<tc>, window_params = [{transform_indices = @transform_0, window_bounds = array<i64: 256, 1>}, {pipeline_mode = #tpu.pipeline_mode<synchronous>, transform_indices = @transform_1, window_bounds = array<i64: 1, 128>}, {pipeline_mode = #tpu.pipeline_mode<synchronous>, transform_indices = @transform_2, window_bounds = array<i64: 1, 128>}, {transform_indices = @transform_3, window_bounds = array<i64: 256, 128>}]} {
    %c0 = arith.constant 0 : index
    %c0_0 = arith.constant 0 : index
    %0 = vector.load %arg1[%c0, %c0_0] : memref<256x1xf32, #tpu.memory_space<vmem>>, vector<256x1xf32>
    %c0_1 = arith.constant 0 : index
    %c0_2 = arith.constant 0 : index
    %1 = vector.load %arg2[%c0_1, %c0_2] : memref<1x128xf32, #tpu.memory_space<vmem>>, vector<1x128xf32>
    %2 = vector.broadcast %0 : vector<256x1xf32> to vector<256x128xf32>
    %3 = vector.broadcast %1 : vector<1x128xf32> to vector<256x128xf32>
    %4 = arith.mulf %2, %3 : vector<256x128xf32>
    %c0_3 = arith.constant 0 : index
    %c0_4 = arith.constant 0 : index
    %5 = vector.load %arg3[%c0_3, %c0_4] : memref<1x128xf32, #tpu.memory_space<vmem>>, vector<1x128xf32>
    %6 = vector.broadcast %5 : vector<1x128xf32> to vector<256x128xf32>
    %7 = arith.addf %4, %6 : vector<256x128xf32>
    %c0_5 = arith.constant 0 : index
    %c0_6 = arith.constant 0 : index
    %8 = vector.load %arg4[%c0_5, %c0_6] : memref<256x128xf32, #tpu.memory_space<vmem>>, vector<256x128xf32>
    tpu.vector_store %arg4[%c0_5, %c0_6], %7 {strides = array<i32>} : memref<256x128xf32, #tpu.memory_space<vmem>>, vector<256x128xf32>,
    return
  }
  func.func @transform_0(%arg0: i32) -> (i32, i32) {
    %c0_i32 = arith.constant 0 : i32
    %c0_i32_0 = arith.constant 0 : i32
    return %arg0, %c0_i32 : i32, i32
  }
  func.func @transform_1(%arg0: i32) -> (i32, i32) {
    %c0_i32 = arith.constant 0 : i32
    %c0_i32_0 = arith.constant 0 : i32
    %c0_i32_1 = arith.constant 0 : i32
    return %c0_i32, %c0_i32_0 : i32, i32
  }
  func.func @transform_2(%arg0: i32) -> (i32, i32) {
    %c0_i32 = arith.constant 0 : i32
    %c0_i32_0 = arith.constant 0 : i32
    %c0_i32_1 = arith.constant 0 : i32
    return %c0_i32, %c0_i32_0 : i32, i32
  }
  func.func @transform_3(%arg0: i32) -> (i32, i32) {
    %c0_i32 = arith.constant 0 : i32
    %c0_i32_0 = arith.constant 0 : i32
    return %arg0, %c0_i32 : i32, i32
  }
}

</mosaic_0001>

<llo_original>
// kernel: tpu_custom_call.1
$region0: #{tpu_custom_call.1}
  #allocation0 [shape = 'u32[]', space=smem, size = 0x4, offset = 0x4, fixed_abs, tag = 'smem constant byte address 0x4 - core index']
  #allocation1 [shape = 'u32[72,128]{1,0:T(1,128)}', space=vmem, size = 0x9000, scoped, tag = 'internal scratch']
  %s0 = inlined_call_operand.vmem [shape: f32[256,1], index: 0, kind: input, shape index: {}]
  %s1 = inlined_call_operand.vmem [shape: f32[1,128], index: 1, kind: input, shape index: {}]
  %s2 = inlined_call_operand.vmem [shape: f32[1,128], index: 2, kind: input, shape index: {}]
  %s3 = inlined_call_operand.hbm [shape: f32[256,128], index: 3, kind: output, shape index: {}]
  %s4 = sld [smem:[#allocation0]]
  $region22: #{tpu_custom_call.1} parent=0
    _
  %s6 = ssub.s32 1, %s4
  %s7 = scalar_select 0, %s6, %s4
  $region1: #{tpu_custom_call.1} parent=0
    #allocation2 [shape = 'u8[131072]{0}', space=vmem, size = 0x20000, scoped, tag = 'output window, operand 0, single buffered']
    #allocation3 [shape = 's32[1]{0}', space=sflag, size = 0x4, scoped, tag = 'scoped memory for tpu_custom_call.1']
    %8 = vsyncpa [#allocation3], 0
    // Predicated region
    $region2: #{tpu_custom_call.1} parent=1 // pred_check
      _
    $region3: #{tpu_custom_call.1} parent=1 // pred_check_branch
      %10 = sbr.rel (0) target = $region5
    $region4: #{tpu_custom_call.1} parent=1 // pred_region
      _
    $region5: #{tpu_custom_call.1} parent=1 // pred_fallthru
      _
    // Predicated region
    $region6: #{tpu_custom_call.1} parent=1 // pred_check
      _
    $region7: #{tpu_custom_call.1} parent=1 // pred_check_branch
      %12 = sbr.rel (0) target = $region9
    $region8: #{tpu_custom_call.1} parent=1 // pred_region
      _
    $region9: #{tpu_custom_call.1} parent=1 // pred_fallthru
      _
    // Predicated region
    $region10: #{tpu_custom_call.1} parent=1 // pred_check
      _
    $region11: #{tpu_custom_call.1} parent=1 // pred_check_branch
      %14 = sbr.rel (0) target = $region13
    $region12: #{tpu_custom_call.1} parent=1 // pred_region
      _
    $region13: #{tpu_custom_call.1} parent=1 // pred_fallthru
      _
    %v15 = vld [vmem:[%s0] sm:$0xff]
    %v16 = vld [vmem:[%s0 + $0x8] sm:$0xff]
    %v17 = vld [vmem:[%s0 + $0x10] sm:$0xff]
    %v18 = vld [vmem:[%s0 + $0x18] sm:$0xff]
    %v19 = vld [vmem:[%s0 + $0x20] sm:$0xff]
    %v20 = vld [vmem:[%s0 + $0x28] sm:$0xff]
    %v21 = vld [vmem:[%s0 + $0x30] sm:$0xff]
    %v22 = vld [vmem:[%s0 + $0x38] sm:$0xff]
    %v23 = vld [vmem:[%s0 + $0x40] sm:$0xff]
    %v24 = vld [vmem:[%s0 + $0x48] sm:$0xff]
    %v25 = vld [vmem:[%s0 + $0x50] sm:$0xff]
    %v26 = vld [vmem:[%s0 + $0x58] sm:$0xff]
    %v27 = vld [vmem:[%s0 + $0x60] sm:$0xff]
    %v28 = vld [vmem:[%s0 + $0x68] sm:$0xff]
    %v29 = vld [vmem:[%s0 + $0x70] sm:$0xff]
    %v30 = vld [vmem:[%s0 + $0x78] sm:$0xff]
    %v31 = vld [vmem:[%s0 + $0x80] sm:$0xff]
    %v32 = vld [vmem:[%s0 + $0x88] sm:$0xff]
    %v33 = vld [vmem:[%s0 + $0x90] sm:$0xff]
    %v34 = vld [vmem:[%s0 + $0x98] sm:$0xff]
    %v35 = vld [vmem:[%s0 + $0xa0] sm:$0xff]
    %v36 = vld [vmem:[%s0 + $0xa8] sm:$0xff]
    %v37 = vld [vmem:[%s0 + $0xb0] sm:$0xff]
    %v38 = vld [vmem:[%s0 + $0xb8] sm:$0xff]
    %v39 = vld [vmem:[%s0 + $0xc0] sm:$0xff]
    %v40 = vld [vmem:[%s0 + $0xc8] sm:$0xff]
    %v41 = vld [vmem:[%s0 + $0xd0] sm:$0xff]
    %v42 = vld [vmem:[%s0 + $0xd8] sm:$0xff]
    %v43 = vld [vmem:[%s0 + $0xe0] sm:$0xff]
    %v44 = vld [vmem:[%s0 + $0xe8] sm:$0xff]
    %v45 = vld [vmem:[%s0 + $0xf0] sm:$0xff]
    %v46 = vld [vmem:[%s0 + $0xf8] sm:$0xff]
    %v47 = vld [vmem:[%s1] sm:$0x1]
    %49 = vset.pattern.permute.xlu0 0
    %50 = vperm.xlu0 %49, %v15
    %v51 = vpop.permute.xlu0 %50
    %54 = vset.pattern.permute.xlu0 0
    %55 = vperm.xlu0 %54, %v16
    %v56 = vpop.permute.xlu0 %55
    %59 = vset.pattern.permute.xlu0 0
    %60 = vperm.xlu0 %59, %v17
    %v61 = vpop.permute.xlu0 %60
    %64 = vset.pattern.permute.xlu0 0
    %65 = vperm.xlu0 %64, %v18
    %v66 = vpop.permute.xlu0 %65
    %69 = vset.pattern.permute.xlu0 0
    %70 = vperm.xlu0 %69, %v19
    %v71 = vpop.permute.xlu0 %70
    %74 = vset.pattern.permute.xlu0 0
    %75 = vperm.xlu0 %74, %v20
    %v76 = vpop.permute.xlu0 %75
    %79 = vset.pattern.permute.xlu0 0
    %80 = vperm.xlu0 %79, %v21
    %v81 = vpop.permute.xlu0 %80
    %84 = vset.pattern.permute.xlu0 0
    %85 = vperm.xlu0 %84, %v22
    %v86 = vpop.permute.xlu0 %85
    %89 = vset.pattern.permute.xlu0 0
    %90 = vperm.xlu0 %89, %v23
    %v91 = vpop.permute.xlu0 %90
    %94 = vset.pattern.permute.xlu0 0
    %95 = vperm.xlu0 %94, %v24
    %v96 = vpop.permute.xlu0 %95
    %99 = vset.pattern.permute.xlu0 0
    %100 = vperm.xlu0 %99, %v25
    %v101 = vpop.permute.xlu0 %100
    %104 = vset.pattern.permute.xlu0 0
    %105 = vperm.xlu0 %104, %v26
    %v106 = vpop.permute.xlu0 %105
    %109 = vset.pattern.permute.xlu0 0
    %110 = vperm.xlu0 %109, %v27
    %v111 = vpop.permute.xlu0 %110
    %114 = vset.pattern.permute.xlu0 0
    %115 = vperm.xlu0 %114, %v28
    %v116 = vpop.permute.xlu0 %115
    %119 = vset.pattern.permute.xlu0 0
    %120 = vperm.xlu0 %119, %v29
    %v121 = vpop.permute.xlu0 %120
    %124 = vset.pattern.permute.xlu0 0
    %125 = vperm.xlu0 %124, %v30
    %v126 = vpop.permute.xlu0 %125
    %129 = vset.pattern.permute.xlu0 0
    %130 = vperm.xlu0 %129, %v31
    %v131 = vpop.permute.xlu0 %130
    %134 = vset.pattern.permute.xlu0 0
    %135 = vperm.xlu0 %134, %v32
    %v136 = vpop.permute.xlu0 %135
    %139 = vset.pattern.permute.xlu0 0
    %140 = vperm.xlu0 %139, %v33
    %v141 = vpop.permute.xlu0 %140
    %144 = vset.pattern.permute.xlu0 0
    %145 = vperm.xlu0 %144, %v34
    %v146 = vpop.permute.xlu0 %145
    %149 = vset.pattern.permute.xlu0 0
    %150 = vperm.xlu0 %149, %v35
    %v151 = vpop.permute.xlu0 %150
    %154 = vset.pattern.permute.xlu0 0
    %155 = vperm.xlu0 %154, %v36
    %v156 = vpop.permute.xlu0 %155
    %159 = vset.pattern.permute.xlu0 0
    %160 = vperm.xlu0 %159, %v37
    %v161 = vpop.permute.xlu0 %160
    %164 = vset.pattern.permute.xlu0 0
    %165 = vperm.xlu0 %164, %v38
    %v166 = vpop.permute.xlu0 %165
    %169 = vset.pattern.permute.xlu0 0
    %170 = vperm.xlu0 %169, %v39
    %v171 = vpop.permute.xlu0 %170
    %174 = vset.pattern.permute.xlu0 0
    %175 = vperm.xlu0 %174, %v40
    %v176 = vpop.permute.xlu0 %175
    %179 = vset.pattern.permute.xlu0 0
    %180 = vperm.xlu0 %179, %v41
    %v181 = vpop.permute.xlu0 %180
    %184 = vset.pattern.permute.xlu0 0
    %185 = vperm.xlu0 %184, %v42
    %v186 = vpop.permute.xlu0 %185
    %189 = vset.pattern.permute.xlu0 0
    %190 = vperm.xlu0 %189, %v43
    %v191 = vpop.permute.xlu0 %190
    %194 = vset.pattern.permute.xlu0 0
    %195 = vperm.xlu0 %194, %v44
    %v196 = vpop.permute.xlu0 %195
    %199 = vset.pattern.permute.xlu0 0
    %200 = vperm.xlu0 %199, %v45
    %v201 = vpop.permute.xlu0 %200
    %204 = vset.pattern.permute.xlu0 0
    %205 = vperm.xlu0 %204, %v46
    %v206 = vpop.permute.xlu0 %205
    %v209 = vperm.slane %v47, 0
    %v211 = vmul.f32 %v51, %v209
    %v212 = vmul.f32 %v56, %v209
    %v213 = vmul.f32 %v61, %v209
    %v214 = vmul.f32 %v66, %v209
    %v215 = vmul.f32 %v71, %v209
    %v216 = vmul.f32 %v76, %v209
    %v217 = vmul.f32 %v81, %v209
    %v218 = vmul.f32 %v86, %v209
    %v219 = vmul.f32 %v91, %v209
    %v220 = vmul.f32 %v96, %v209
    %v221 = vmul.f32 %v101, %v209
    %v222 = vmul.f32 %v106, %v209
    %v223 = vmul.f32 %v111, %v209
    %v224 = vmul.f32 %v116, %v209
    %v225 = vmul.f32 %v121, %v209
    %v226 = vmul.f32 %v126, %v209
    %v227 = vmul.f32 %v131, %v209
    %v228 = vmul.f32 %v136, %v209
    %v229 = vmul.f32 %v141, %v209
    %v230 = vmul.f32 %v146, %v209
    %v231 = vmul.f32 %v151, %v209
    %v232 = vmul.f32 %v156, %v209
    %v233 = vmul.f32 %v161, %v209
    %v234 = vmul.f32 %v166, %v209
    %v235 = vmul.f32 %v171, %v209
    %v236 = vmul.f32 %v176, %v209
    %v237 = vmul.f32 %v181, %v209
    %v238 = vmul.f32 %v186, %v209
    %v239 = vmul.f32 %v191, %v209
    %v240 = vmul.f32 %v196, %v209
    %v241 = vmul.f32 %v201, %v209
    %v242 = vmul.f32 %v206, %v209
    %v243 = vld [vmem:[%s2] sm:$0x1]
    %v245 = vperm.slane %v243, 0
    %v247 = vadd.f32 %v211, %v245
    %v248 = vadd.f32 %v212, %v245
    %v249 = vadd.f32 %v213, %v245
    %v250 = vadd.f32 %v214, %v245
    %v251 = vadd.f32 %v215, %v245
    %v252 = vadd.f32 %v216, %v245
    %v253 = vadd.f32 %v217, %v245
    %v254 = vadd.f32 %v218, %v245
    %v255 = vadd.f32 %v219, %v245
    %v256 = vadd.f32 %v220, %v245
    %v257 = vadd.f32 %v221, %v245
    %v258 = vadd.f32 %v222, %v245
    %v259 = vadd.f32 %v223, %v245
    %v260 = vadd.f32 %v224, %v245
    %v261 = vadd.f32 %v225, %v245
    %v262 = vadd.f32 %v226, %v245
    %v263 = vadd.f32 %v227, %v245
    %v264 = vadd.f32 %v228, %v245
    %v265 = vadd.f32 %v229, %v245
    %v266 = vadd.f32 %v230, %v245
    %v267 = vadd.f32 %v231, %v245
    %v268 = vadd.f32 %v232, %v245
    %v269 = vadd.f32 %v233, %v245
    %v270 = vadd.f32 %v234, %v245
    %v271 = vadd.f32 %v235, %v245
    %v272 = vadd.f32 %v236, %v245
    %v273 = vadd.f32 %v237, %v245
    %v274 = vadd.f32 %v238, %v245
    %v275 = vadd.f32 %v239, %v245
    %v276 = vadd.f32 %v240, %v245
    %v277 = vadd.f32 %v241, %v245
    %v278 = vadd.f32 %v242, %v245
    %279 = vst [vmem:[#allocation2] sm:$0xff] %v247
    %280 = vst [vmem:[#allocation2 + $0x8] sm:$0xff] %v248
    %281 = vst [vmem:[#allocation2 + $0x10] sm:$0xff] %v249
    %282 = vst [vmem:[#allocation2 + $0x18] sm:$0xff] %v250
    %283 = vst [vmem:[#allocation2 + $0x20] sm:$0xff] %v251
    %284 = vst [vmem:[#allocation2 + $0x28] sm:$0xff] %v252
    %285 = vst [vmem:[#allocation2 + $0x30] sm:$0xff] %v253
    %286 = vst [vmem:[#allocation2 + $0x38] sm:$0xff] %v254
    %287 = vst [vmem:[#allocation2 + $0x40] sm:$0xff] %v255
    %288 = vst [vmem:[#allocation2 + $0x48] sm:$0xff] %v256
    %289 = vst [vmem:[#allocation2 + $0x50] sm:$0xff] %v257
    %290 = vst [vmem:[#allocation2 + $0x58] sm:$0xff] %v258
    %291 = vst [vmem:[#allocation2 + $0x60] sm:$0xff] %v259
    %292 = vst [vmem:[#allocation2 + $0x68] sm:$0xff] %v260
    %293 = vst [vmem:[#allocation2 + $0x70] sm:$0xff] %v261
    %294 = vst [vmem:[#allocation2 + $0x78] sm:$0xff] %v262
    %295 = vst [vmem:[#allocation2 + $0x80] sm:$0xff] %v263
    %296 = vst [vmem:[#allocation2 + $0x88] sm:$0xff] %v264
    %297 = vst [vmem:[#allocation2 + $0x90] sm:$0xff] %v265
    %298 = vst [vmem:[#allocation2 + $0x98] sm:$0xff] %v266
    %299 = vst [vmem:[#allocation2 + $0xa0] sm:$0xff] %v267
    %300 = vst [vmem:[#allocation2 + $0xa8] sm:$0xff] %v268
    %301 = vst [vmem:[#allocation2 + $0xb0] sm:$0xff] %v269
    %302 = vst [vmem:[#allocation2 + $0xb8] sm:$0xff] %v270
    %303 = vst [vmem:[#allocation2 + $0xc0] sm:$0xff] %v271
    %304 = vst [vmem:[#allocation2 + $0xc8] sm:$0xff] %v272
    %305 = vst [vmem:[#allocation2 + $0xd0] sm:$0xff] %v273
    %306 = vst [vmem:[#allocation2 + $0xd8] sm:$0xff] %v274
    %307 = vst [vmem:[#allocation2 + $0xe0] sm:$0xff] %v275
    %308 = vst [vmem:[#allocation2 + $0xe8] sm:$0xff] %v276
    %309 = vst [vmem:[#allocation2 + $0xf0] sm:$0xff] %v277
    %310 = vst [vmem:[#allocation2 + $0xf8] sm:$0xff] %v278
    // Predicated region
    $region14: #{tpu_custom_call.1} parent=1 // pred_check
      _
    $region15: #{tpu_custom_call.1} parent=1 // pred_check_branch
      %312 = sbr.rel (0) target = $region17
    $region16: #{tpu_custom_call.1} parent=1 // pred_region
      %314 = vsyncadd [#allocation3], 0
      %s315 = sshll.u32 [#allocation2], 4
      %s316 = int_to_ptr.vmem [resolvable:$true] %s315
      %s317 = sshll.u32 %s3, 4
      %s318 = int_to_ptr.hbm [resolvable:$true] %s317
      %323 = dma.vmem_to_hbm [thread:$0]  %s316, 4096, %s318, [#allocation3], 128, 128, 8
    $region17: #{tpu_custom_call.1} parent=1 // pred_fallthru
      _
    // Predicated region
    $region18: #{tpu_custom_call.1} parent=1 // pred_check
      _
    $region19: #{tpu_custom_call.1} parent=1 // pred_check_branch
      %325 = sbr.rel (0) target = $region21
    $region20: #{tpu_custom_call.1} parent=1 // pred_region
      %327 = dma.done [#allocation3], 4096
    $region21: #{tpu_custom_call.1} parent=1 // pred_fallthru
      _
    %328 = vsyncpa [#allocation3], 1

</llo_original>
